<compile_context>
chip_gen: v6e
topology: v6e:2x2x1
jax: 0.10.0
libtpu: 0.0.40
codegen_flags: <defaults>
</compile_context>

<pallas_src>
import functools

import jax
import jax.numpy as jnp
from jax import lax
from jax.experimental import pallas as pl
from jax.experimental.pallas import tpu as pltpu


def _round_up(x, m):
    return ((x + m - 1) // m) * m


def _vmem_capacity_bytes():
    try:
        return int(pltpu.get_tpu_info().vmem_capacity_bytes)
    except Exception:
        return 128 * 1024 * 1024


def _pick_tiles(num_anchors, num_contrast, d_pad, feat_isz, has_mask_tile,
                budget, two_cores):
    """Largest (tq, tk) that fit the VMEM budget; tk up to full padded N."""
    n_full = _round_up(num_contrast, 128)

    if num_anchors <= 256:
        tq = _round_up(num_anchors, 8)
        if two_cores and num_anchors >= 64:
            # keep both TensorCores busy on 2-TC chips
            tq = _round_up(-(-num_anchors // 2), 8)
    elif num_anchors >= 1024:
        tq = 512
    else:
        tq = 256

    def vmem_bytes(tq_, tk_):
        feats = 2 * (tq_ + tk_) * d_pad * feat_isz      # double-buffered feature tiles
        temps = 8 * tq_ * tk_ * 4                       # f32 (tq,tk) tile temporaries
        accs = 6 * tq_ * 4                              # row accumulators + out buffers
        side = 2 * tq_ * tk_ * 4 if has_mask_tile else 2 * (tq_ + tk_) * 4
        return feats + temps + accs + side

    tk = n_full
    while vmem_bytes(tq, tk) > budget and tk > 256:
        tk = max(256, _round_up(tk // 2, 256))
    if vmem_bytes(tq, tk) > budget and tk > 128:
        tk = 128
    while vmem_bytes(tq, tk) > budget and tq > 8:
        tq = max(8, _round_up(tq // 2, 8))
    return tq, tk, vmem_bytes(tq, tk)


def _online_tile_update(adc, pos, out_ref, m_acc, l_acc, pd_acc, pc_acc,
                        *, loss_scale, num_contrast, pad_cols):
    """Online (flash-style) update for one (tq, tk) tile.

    adc: (tq, tk) f32 tile of anchor.contrast^T / temperature (temperature is
         pre-folded into the anchor operand in the wrapper).
    pos: (tq, tk) f32 positive-pair mask tile (self entries removed below only
         on diagonal-crossing tiles).
    """
    qi = pl.program_id(0)
    ki = pl.program_id(1)
    tq, tk = adc.shape

    @pl.when(ki == 0)
    def _init():
        m_acc[...] = jnp.full_like(m_acc, -jnp.inf)
        l_acc[...] = jnp.zeros_like(l_acc)
        pd_acc[...] = jnp.zeros_like(pd_acc)
        pc_acc[...] = jnp.zeros_like(pc_acc)

    m_prev = m_acc[...]
    # Padded contrast columns have adc == 0 <= self-logit (>= 0), so including
    # them in the max is a valid stabilization constant.
    m_new = jnp.maximum(m_prev, jnp.max(adc, axis=1, keepdims=True))
    alpha = jnp.exp(m_prev - m_new)
    p = jnp.exp(adc - m_new)

    if pad_cols:  # static: only compiled in when N was padded up to n_pad
        col_ids = ki * tk + lax.broadcasted_iota(jnp.int32, (1, tk), 1)
        p = jnp.where(col_ids < num_contrast, p, 0.0)
        # `pos` is already 0 on padded columns for every VALID anchor row
        # (padded col labels are -1 vs valid labels >= 0; mask_p is
        # zero-padded).  Padded anchor rows may see spurious positives but are
        # sliced off before the mean.

    l_acc[...] = alpha * l_acc[...] + jnp.sum(p, axis=1, keepdims=True)
    pd_acc[...] = pd_acc[...] + jnp.sum(pos * adc, axis=1, keepdims=True)
    pc_acc[...] = pc_acc[...] + jnp.sum(pos, axis=1, keepdims=True)
    m_acc[...] = m_new

    # Self-contrast exclusion, only on tiles crossed by the global diagonal.
    @pl.when(jnp.logical_and(qi * tq < (ki + 1) * tk, ki * tk < (qi + 1) * tq))
    def _remove_self():
        row_ids = qi * tq + lax.broadcasted_iota(jnp.int32, (tq, 1), 0)
        col_ids = ki * tk + lax.broadcasted_iota(jnp.int32, (1, tk), 1)
        is_self = row_ids == col_ids
        self_p = jnp.where(is_self, p, 0.0)
        self_pos = jnp.where(is_self, pos, 0.0)
        l_acc[...] = l_acc[...] - jnp.sum(self_p, axis=1, keepdims=True)
        pd_acc[...] = pd_acc[...] - jnp.sum(self_pos * adc, axis=1, keepdims=True)
        pc_acc[...] = pc_acc[...] - jnp.sum(self_pos, axis=1, keepdims=True)

    @pl.when(ki == pl.num_programs(1) - 1)
    def _finalize():
        # sum_j pos_j * log_prob_j = pd - pc * (m + log l)
        mean_log_prob_pos = (pd_acc[...] / pc_acc[...]
                             - (m_acc[...] + jnp.log(l_acc[...])))
        out_ref[...] = (-loss_scale * mean_log_prob_pos).astype(out_ref.dtype)


def _supcon_label_kernel(row_lab_ref, col_lab_ref, q_ref, kT_ref, out_ref,
                         m_acc, l_acc, pd_acc, pc_acc,
                         *, loss_scale, num_contrast, pad_cols):
    # anchor tile already carries the 1/temperature scale; canonical
    # (tq,d)x(d,tk) contraction -> MXU, f32 accumulation, no in-kernel transpose.
    adc = lax.dot_general(q_ref[...], kT_ref[...],
                          (((1,), (0,)), ((), ())),
                          preferred_element_type=jnp.float32)
    pos = (row_lab_ref[...] == col_lab_ref[...]).astype(jnp.float32)
    _online_tile_update(adc, pos, out_ref, m_acc, l_acc, pd_acc, pc_acc,
                        loss_scale=loss_scale, num_contrast=num_contrast,
                        pad_cols=pad_cols)


def _supcon_mask_kernel(mask_ref, q_ref, kT_ref, out_ref,
                        m_acc, l_acc, pd_acc, pc_acc,
                        *, loss_scale, num_contrast, pad_cols):
    adc = lax.dot_general(q_ref[...], kT_ref[...],
                          (((1,), (0,)), ((), ())),
                          preferred_element_type=jnp.float32)
    pos = mask_ref[...].astype(jnp.float32)
    _online_tile_update(adc, pos, out_ref, m_acc, l_acc, pd_acc, pc_acc,
                        loss_scale=loss_scale, num_contrast=num_contrast,
                        pad_cols=pad_cols)


def supcon_v2_loss(features, labels=None, mask=None,
                   temperature=0.5, contrast_mode='all', base_temperature=0.5,
                   compute_dtype=None):
    """JAX/Pallas equivalent of SupConV2Loss.forward. Returns a scalar (f32).

    compute_dtype: optional dtype (e.g. jnp.bfloat16) for the MXU operands;
    accumulation is always f32.  Default keeps the input feature dtype.
    """
    features = jnp.asarray(features)
    if features.ndim < 3:
        raise ValueError('`features` needs to be [bsz, n_views, ...], '
                         'at least 3 dimensions are required')
    if features.ndim > 3:
        features = features.reshape(features.shape[0], features.shape[1], -1)
    bsz, n_views, dim = features.shape

    if labels is not None and mask is not None:
        raise ValueError('Cannot define both `labels` and `mask`')

    if contrast_mode == 'one':
        anchor_count = 1
    elif contrast_mode == 'all':
        anchor_count = n_views
    else:
        raise ValueError('Unknown mode: {}'.format(contrast_mode))

    # contrast_feature = cat(unbind(features, dim=1), dim=0): view-major [N, D]
    contrast = jnp.transpose(features, (1, 0, 2)).reshape(n_views * bsz, dim)
    num_anchors = anchor_count * bsz     # M
    num_contrast = n_views * bsz         # N
    anchor = contrast[:num_anchors]      # 'one' -> view-0 rows; 'all' -> all rows

    cdtype = jnp.dtype(compute_dtype) if compute_dtype is not None \
        else jnp.dtype(features.dtype)
    feat_isz = cdtype.itemsize
    d_pad = _round_up(dim, 128)

    # ---- generation-aware VMEM budget / tiling -----------------------------
    vmem_cap = _vmem_capacity_bytes()
    if vmem_cap <= 64 * 1024 * 1024:           # v7x-class: 64 MiB/TC, 2 TCs
        budget, limit_cap, two_cores = 24 << 20, 48 << 20, True
    else:                                      # v5e/v6e-class: 128 MiB/TC, 1 TC
        budget, limit_cap, two_cores = 48 << 20, 64 << 20, False

    tq, tk, vmem_need = _pick_tiles(num_anchors, num_contrast, d_pad, feat_isz,
                                    has_mask_tile=(mask is not None),
                                    budget=budget, two_cores=two_cores)

    m_pad = _round_up(num_anchors, tq)
    n_pad = _round_up(num_contrast, tk)
    grid = (m_pad // tq, n_pad // tk)
    pad_cols = n_pad != num_contrast

    inv_temp = 1.0 / float(temperature)
    loss_scale = float(temperature) / float(base_temperature)

    # 1/temperature folded into the anchor operand here (hoisted out of the
    # kernel's per-ki loop); contrast stored pre-transposed (d_pad, n_pad).
    anchor_scaled = (anchor.astype(jnp.float32) * inv_temp).astype(cdtype)
    anchor_p = jnp.zeros((m_pad, d_pad), cdtype)
    anchor_p = anchor_p.at[:num_anchors, :dim].set(anchor_scaled)
    contrast_pT = jnp.zeros((d_pad, n_pad), cdtype)
    contrast_pT = contrast_pT.at[:dim, :num_contrast].set(contrast.T.astype(cdtype))

    compiler_params = pltpu.CompilerParams(
        dimension_semantics=("parallel", "arbitrary"),
        vmem_limit_bytes=int(min(limit_cap,
                                 max(32 * 1024 * 1024, vmem_need + vmem_need // 2))),
    )
    contrast_streams = grid[0] if grid[1] > 1 else 1
    bytes_feat = (m_pad * d_pad + contrast_streams * n_pad * d_pad) * feat_isz
    bytes_side = (m_pad * n_pad * 4) if mask is not None else ((m_pad + n_pad) * 4)
    cost = pl.CostEstimate(
        flops=2 * m_pad * n_pad * d_pad + 12 * m_pad * n_pad,
        transcendentals=m_pad * n_pad + 4 * m_pad,
        bytes_accessed=bytes_feat + bytes_side + m_pad * 4,
    )

    out_shape = jax.ShapeDtypeStruct((m_pad, 1), jnp.float32)
    out_spec = pl.BlockSpec((tq, 1), lambda qi, ki: (qi, 0))
    feat_specs = [
        pl.BlockSpec((tq, d_pad), lambda qi, ki: (qi, 0)),   # anchor tile
        pl.BlockSpec((d_pad, tk), lambda qi, ki: (0, ki)),   # contrast^T tile
    ]
    scratch = [pltpu.VMEM((tq, 1), jnp.float32)] * 4

    if mask is None:
        # labels / SimCLR path: positive mask built in-kernel from label ids;
        # no [M, N] mask ever touches HBM or VMEM.
        if labels is None:
            base_lab = jnp.arange(bsz, dtype=jnp.int32)        # identity mask
        else:
            labels = jnp.asarray(labels).reshape(-1)
            if labels.shape[0] != bsz:
                raise ValueError('Num of labels does not match num of features')
            base_lab = labels.astype(jnp.int32)
        lab_contrast = jnp.tile(base_lab, n_views)                       # [N]
        row_lab = jnp.full((m_pad, 1), -1, jnp.int32)
        row_lab = row_lab.at[:num_anchors, 0].set(lab_contrast[:num_anchors])
        col_lab = jnp.full((1, n_pad), -1, jnp.int32)
        col_lab = col_lab.at[0, :num_contrast].set(lab_contrast)

        kernel = functools.partial(_supcon_label_kernel,
                                   loss_scale=loss_scale,
                                   num_contrast=num_contrast, pad_cols=pad_cols)
        per_anchor = pl.pallas_call(
            kernel,
            out_shape=out_shape,
            grid_spec=pltpu.PrefetchScalarGridSpec(
                num_scalar_prefetch=0,
                grid=grid,
                in_specs=[
                    pl.BlockSpec((tq, 1), lambda qi, ki: (qi, 0)),
                    pl.BlockSpec((1, tk), lambda qi, ki: (0, ki)),
                ] + feat_specs,
                out_specs=out_spec,
                scratch_shapes=scratch),
            compiler_params=compiler_params,
            cost_estimate=cost,
        )(row_lab, col_lab, anchor_p, contrast_pT)
    else:
        # user-supplied [bsz, bsz] mask (possibly asymmetric): cannot be
        # expressed via label equality, so stream (tq, tk) blocks of the tiled
        # mask (rare fallback path, still VMEM-safe).
        mask = jnp.asarray(mask, jnp.float32)
        mask_full = jnp.tile(mask, (anchor_count, n_views))              # [M,N]
        mask_p = jnp.zeros((m_pad, n_pad), jnp.float32)
        mask_p = mask_p.at[:num_anchors, :num_contrast].set(mask_full)

        kernel = functools.partial(_supcon_mask_kernel,
                                   loss_scale=loss_scale,
                                   num_contrast=num_contrast, pad_cols=pad_cols)
        per_anchor = pl.pallas_call(
            kernel,
            out_shape=out_shape,
            grid_spec=pltpu.PrefetchScalarGridSpec(
                num_scalar_prefetch=0,
                grid=grid,
                in_specs=[
                    pl.BlockSpec((tq, tk), lambda qi, ki: (qi, ki)),
                ] + feat_specs,
                out_specs=out_spec,
                scratch_shapes=scratch),
            compiler_params=compiler_params,
            cost_estimate=cost,
        )(mask_p, anchor_p, contrast_pT)

    # loss.view(anchor_count, batch_size).mean()  (padded rows sliced off)
    return jnp.mean(per_anchor.reshape(-1)[:num_anchors])


def _supcon_reference(features, labels=None, mask=None,
                      temperature=0.5, contrast_mode='all', base_temperature=0.5):
    """Pure-JAX port of the PyTorch forward (for verification)."""
    features = jnp.asarray(features)
    if features.ndim > 3:
        features = features.reshape(features.shape[0], features.shape[1], -1)
    bsz, n_views, dim = features.shape
    if labels is None and mask is None:
        mask = jnp.eye(bsz, dtype=jnp.float32)
    elif labels is not None:
        labels = jnp.asarray(labels).reshape(-1, 1)
        mask = (labels == labels.T).astype(jnp.float32)
    else:
        mask = jnp.asarray(mask, jnp.float32)
    cf = jnp.transpose(features, (1, 0, 2)).reshape(n_views * bsz, dim)
    cf = cf.astype(jnp.float32)
    if contrast_mode == 'one':
        af, anchor_count = cf[:bsz], 1
    else:
        af, anchor_count = cf, n_views
    M, N = anchor_count * bsz, n_views * bsz
    adc = (af @ cf.T) / temperature
    logits = adc - jnp.max(adc, axis=1, keepdims=True)
    mask = jnp.tile(mask, (anchor_count, n_views))
    logits_mask = 1.0 - jnp.eye(M, N, dtype=jnp.float32)
    mask = mask * logits_mask
    exp_logits = jnp.exp(logits) * logits_mask
    log_prob = logits - jnp.log(jnp.sum(exp_logits, axis=1, keepdims=True))
    mlpp = jnp.sum(mask * log_prob, axis=1) / jnp.sum(mask, axis=1)
    return jnp.mean(-(temperature / base_temperature) * mlpp)


if __name__ == "__main__":
    key = jax.random.PRNGKey(0)
    k1, k2, k3 = jax.random.split(key, 3)

    bsz, n_views, dim = 8, 2, 32
    feats = jax.random.normal(k1, (bsz, n_views, dim), dtype=jnp.float32)
    feats = feats / jnp.linalg.norm(feats, axis=-1, keepdims=True)
    labels = jax.random.randint(k2, (bsz,), 0, 3)
    rnd = jax.random.bernoulli(k3, 0.3, (bsz, bsz)).astype(jnp.float32)
    user_mask = jnp.clip(rnd + rnd.T + jnp.eye(bsz), 0.0, 1.0)

    cases = [
        dict(labels=labels),                        # supervised, 'all'
        dict(),                                     # SimCLR (no labels), 'all'
        dict(mask=user_mask),                       # user-supplied mask, 'all'
        dict(labels=labels, contrast_mode='one'),   # supervised, 'one'
    ]
    for kwargs in cases:
        got = supcon_v2_loss(feats, temperature=0.5, base_temperature=0.5, **kwargs)
        jax.block_until_ready(got)
        want = _supcon_reference(feats, temperature=0.5, base_temperature=0.5,
                                 **kwargs)
        assert jnp.allclose(got, want, rtol=1e-4, atol=1e-4), (
            sorted(kwargs.keys()), got, want)

    # bf16 MXU-operand fast path (f32 accumulation): looser tolerance.
    got_bf16 = supcon_v2_loss(feats, labels=labels, temperature=0.5,
                              base_temperature=0.5, compute_dtype=jnp.bfloat16)
    jax.block_until_ready(got_bf16)
    want = _supcon_reference(feats, labels=labels, temperature=0.5,
                             base_temperature=0.5)
    assert jnp.allclose(got_bf16, want, rtol=5e-2, atol=5e-2), (got_bf16, want)

    print("KERNEL_OK")
</pallas_src>

<mosaic_0001>
module attributes {stable_mosaic.version = 11 : i64} {
  func.func @_supcon_label_kernel(%arg0: i32, %arg1: i32, %arg2: memref<16x1xi32, #tpu.memory_space<vmem>>, %arg3: memref<1x128xi32, #tpu.memory_space<vmem>>, %arg4: memref<16x128xf32, #tpu.memory_space<vmem>>, %arg5: memref<128x128xf32, #tpu.memory_space<vmem>>, %arg6: memref<16x1xf32, #tpu.memory_space<vmem>>, %arg7: memref<16x1xf32, #tpu.memory_space<vmem>>, %arg8: memref<16x1xf32, #tpu.memory_space<vmem>>, %arg9: memref<16x1xf32, #tpu.memory_space<vmem>>, %arg10: memref<16x1xf32, #tpu.memory_space<vmem>>) attributes {dimension_semantics = [#tpu.dimension_semantics<parallel>, #tpu.dimension_semantics<arbitrary>], iteration_bounds = array<i64: 1, 1>, scalar_prefetch = 0 : i64, scratch_operands = 4 : i64, tpu.core_type = #tpu.core_type<tc>, window_params = [{transform_indices = @transform_0, window_bounds = array<i64: 16, 1>}, {transform_indices = @transform_1, window_bounds = array<i64: 1, 128>}, {transform_indices = @transform_2, window_bounds = array<i64: 16, 128>}, {transform_indices = @transform_3, window_bounds = array<i64: 128, 128>}, {transform_indices = @transform_4, window_bounds = array<i64: 16, 1>}]} {
    %c0 = arith.constant 0 : index
    %c0_0 = arith.constant 0 : index
    %0 = vector.load %arg4[%c0, %c0_0] : memref<16x128xf32, #tpu.memory_space<vmem>>, vector<16x128xf32>
    %c0_1 = arith.constant 0 : index
    %c0_2 = arith.constant 0 : index
    %1 = vector.load %arg5[%c0_1, %c0_2] : memref<128x128xf32, #tpu.memory_space<vmem>>, vector<128x128xf32>
    %cst = arith.constant dense<0.000000e+00> : vector<16x128xf32>
    %2 = tpu.matmul %0, %1, %cst {dimension_numbers = #tpu.dot_dimension_numbers<[1], [0], [0], [1], [0, 0, 1, 1], [], []>} : vector<16x128xf32>, vector<128x128xf32>, vector<16x128xf32> -> vector<16x128xf32>
    %c0_3 = arith.constant 0 : index
    %c0_4 = arith.constant 0 : index
    %3 = vector.load %arg2[%c0_3, %c0_4] : memref<16x1xi32, #tpu.memory_space<vmem>>, vector<16x1xi32>
    %c0_5 = arith.constant 0 : index
    %c0_6 = arith.constant 0 : index
    %4 = vector.load %arg3[%c0_5, %c0_6] : memref<1x128xi32, #tpu.memory_space<vmem>>, vector<1x128xi32>
    %5 = vector.broadcast %3 : vector<16x1xi32> to vector<16x128xi32>
    %6 = vector.broadcast %4 : vector<1x128xi32> to vector<16x128xi32>
    %7 = arith.cmpi eq, %5, %6 : vector<16x128xi32>
    %8 = arith.extui %7 : vector<16x128xi1> to vector<16x128xi32>
    %9 = arith.sitofp %8 : vector<16x128xi32> to vector<16x128xf32>
    %c0_i32 = arith.constant 0 : i32
    %10 = arith.cmpi eq, %arg1, %c0_i32 : i32
    %11 = arith.extui %10 : i1 to i32
    %c0_i32_7 = arith.constant 0 : i32
    %12 = arith.cmpi ne, %11, %c0_i32_7 : i32
    scf.if %12 {
      %cst_37 = arith.constant 0xFF800000 : f32
      %64 = vector.broadcast %cst_37 : f32 to vector<16x1xf32>
      %c0_38 = arith.constant 0 : index
      %c0_39 = arith.constant 0 : index
      %65 = vector.load %arg7[%c0_38, %c0_39] : memref<16x1xf32, #tpu.memory_space<vmem>>, vector<16x1xf32>
      tpu.vector_store %arg7[%c0_38, %c0_39], %64 {strides = array<i32>} : memref<16x1xf32, #tpu.memory_space<vmem>>, vector<16x1xf32>,
      %cst_40 = arith.constant 0.000000e+00 : f32
      %66 = vector.broadcast %cst_40 : f32 to vector<16x1xf32>
      %c0_41 = arith.constant 0 : index
      %c0_42 = arith.constant 0 : index
      %67 = vector.load %arg8[%c0_41, %c0_42] : memref<16x1xf32, #tpu.memory_space<vmem>>, vector<16x1xf32>
      tpu.vector_store %arg8[%c0_41, %c0_42], %66 {strides = array<i32>} : memref<16x1xf32, #tpu.memory_space<vmem>>, vector<16x1xf32>,
      %cst_43 = arith.constant 0.000000e+00 : f32
      %68 = vector.broadcast %cst_43 : f32 to vector<16x1xf32>
      %c0_44 = arith.constant 0 : index
      %c0_45 = arith.constant 0 : index
      %69 = vector.load %arg9[%c0_44, %c0_45] : memref<16x1xf32, #tpu.memory_space<vmem>>, vector<16x1xf32>
      tpu.vector_store %arg9[%c0_44, %c0_45], %68 {strides = array<i32>} : memref<16x1xf32, #tpu.memory_space<vmem>>, vector<16x1xf32>,
      %cst_46 = arith.constant 0.000000e+00 : f32
      %70 = vector.broadcast %cst_46 : f32 to vector<16x1xf32>
      %c0_47 = arith.constant 0 : index
      %c0_48 = arith.constant 0 : index
      %71 = vector.load %arg10[%c0_47, %c0_48] : memref<16x1xf32, #tpu.memory_space<vmem>>, vector<16x1xf32>
      tpu.vector_store %arg10[%c0_47, %c0_48], %70 {strides = array<i32>} : memref<16x1xf32, #tpu.memory_space<vmem>>, vector<16x1xf32>,
    } else {
    }
    %c0_8 = arith.constant 0 : index
    %c0_9 = arith.constant 0 : index
    %13 = vector.load %arg7[%c0_8, %c0_9] : memref<16x1xf32, #tpu.memory_space<vmem>>, vector<16x1xf32>
    %cst_10 = arith.constant dense<0xFF800000> : vector<16xf32>
    %14 = vector.multi_reduction <maximumf>, %2, %cst_10 [1] : vector<16x128xf32> to vector<16xf32>
    %15 = vector.shape_cast %14 : vector<16xf32> to vector<16x1xf32>
    %16 = arith.maximumf %13, %15 : vector<16x1xf32>
    %17 = arith.subf %13, %16 : vector<16x1xf32>
    %18 = math.exp %17 : vector<16x1xf32>
    %19 = vector.broadcast %16 : vector<16x1xf32> to vector<16x128xf32>
    %20 = arith.subf %2, %19 : vector<16x128xf32>
    %21 = math.exp %20 : vector<16x128xf32>
    %c128_i32 = arith.constant 128 : i32
    %22 = arith.muli %arg1, %c128_i32 : i32
    %23 = tpu.iota {dimensions = array<i32: 1>} : vector<1x128xi32>
    %24 = vector.broadcast %22 : i32 to vector<1x128xi32>
    %25 = arith.addi %24, %23 : vector<1x128xi32>
    %c16_i32 = arith.constant 16 : i32
    %26 = vector.broadcast %c16_i32 : i32 to vector<1x128xi32>
    %27 = arith.cmpi slt, %25, %26 : vector<1x128xi32>
    %cst_11 = arith.constant 0.000000e+00 : f32
    %28 = vector.shape_cast %27 : vector<1x128xi1> to vector<1x128xi1>
    %29 = vector.broadcast %28 : vector<1x128xi1> to vector<16x128xi1>
    %30 = vector.broadcast %cst_11 : f32 to vector<16x128xf32>
    %31 = arith.select %29, %21, %30 : vector<16x128xi1>, vector<16x128xf32>
    %c0_12 = arith.constant 0 : index
    %c0_13 = arith.constant 0 : index
    %32 = vector.load %arg8[%c0_12, %c0_13] : memref<16x1xf32, #tpu.memory_space<vmem>>, vector<16x1xf32>
    %33 = arith.mulf %18, %32 : vector<16x1xf32>
    %cst_14 = arith.constant dense<0.000000e+00> : vector<16xf32>
    %34 = vector.multi_reduction <add>, %31, %cst_14 [1] : vector<16x128xf32> to vector<16xf32>
    %35 = vector.shape_cast %34 : vector<16xf32> to vector<16x1xf32>
    %36 = arith.addf %33, %35 : vector<16x1xf32>
    %c0_15 = arith.constant 0 : index
    %c0_16 = arith.constant 0 : index
    %37 = vector.load %arg8[%c0_15, %c0_16] : memref<16x1xf32, #tpu.memory_space<vmem>>, vector<16x1xf32>
    tpu.vector_store %arg8[%c0_15, %c0_16], %36 {strides = array<i32>} : memref<16x1xf32, #tpu.memory_space<vmem>>, vector<16x1xf32>,
    %c0_17 = arith.constant 0 : index
    %c0_18 = arith.constant 0 : index
    %38 = vector.load %arg9[%c0_17, %c0_18] : memref<16x1xf32, #tpu.memory_space<vmem>>, vector<16x1xf32>
    %39 = arith.mulf %9, %2 : vector<16x128xf32>
    %cst_19 = arith.constant dense<0.000000e+00> : vector<16xf32>
    %40 = vector.multi_reduction <add>, %39, %cst_19 [1] : vector<16x128xf32> to vector<16xf32>
    %41 = vector.shape_cast %40 : vector<16xf32> to vector<16x1xf32>
    %42 = arith.addf %38, %41 : vector<16x1xf32>
    %c0_20 = arith.constant 0 : index
    %c0_21 = arith.constant 0 : index
    %43 = vector.load %arg9[%c0_20, %c0_21] : memref<16x1xf32, #tpu.memory_space<vmem>>, vector<16x1xf32>
    tpu.vector_store %arg9[%c0_20, %c0_21], %42 {strides = array<i32>} : memref<16x1xf32, #tpu.memory_space<vmem>>, vector<16x1xf32>,
    %c0_22 = arith.constant 0 : index
    %c0_23 = arith.constant 0 : index
    %44 = vector.load %arg10[%c0_22, %c0_23] : memref<16x1xf32, #tpu.memory_space<vmem>>, vector<16x1xf32>
    %cst_24 = arith.constant dense<0.000000e+00> : vector<16xf32>
    %45 = vector.multi_reduction <add>, %9, %cst_24 [1] : vector<16x128xf32> to vector<16xf32>
    %46 = vector.shape_cast %45 : vector<16xf32> to vector<16x1xf32>
    %47 = arith.addf %44, %46 : vector<16x1xf32>
    %c0_25 = arith.constant 0 : index
    %c0_26 = arith.constant 0 : index
    %48 = vector.load %arg10[%c0_25, %c0_26] : memref<16x1xf32, #tpu.memory_space<vmem>>, vector<16x1xf32>
    tpu.vector_store %arg10[%c0_25, %c0_26], %47 {strides = array<i32>} : memref<16x1xf32, #tpu.memory_space<vmem>>, vector<16x1xf32>,
    %c0_27 = arith.constant 0 : index
    %c0_28 = arith.constant 0 : index
    %49 = vector.load %arg7[%c0_27, %c0_28] : memref<16x1xf32, #tpu.memory_space<vmem>>, vector<16x1xf32>
    tpu.vector_store %arg7[%c0_27, %c0_28], %16 {strides = array<i32>} : memref<16x1xf32, #tpu.memory_space<vmem>>, vector<16x1xf32>,
    %c16_i32_29 = arith.constant 16 : i32
    %50 = arith.muli %arg0, %c16_i32_29 : i32
    %c1_i32 = arith.constant 1 : i32
    %51 = arith.addi %arg1, %c1_i32 : i32
    %c128_i32_30 = arith.constant 128 : i32
    %52 = arith.muli %51, %c128_i32_30 : i32
    %53 = arith.cmpi slt, %50, %52 : i32
    %c128_i32_31 = arith.constant 128 : i32
    %54 = arith.muli %arg1, %c128_i32_31 : i32
    %c1_i32_32 = arith.constant 1 : i32
    %55 = arith.addi %arg0, %c1_i32_32 : i32
    %c16_i32_33 = arith.constant 16 : i32
    %56 = arith.muli %55, %c16_i32_33 : i32
    %57 = arith.cmpi slt, %54, %56 : i32
    %58 = arith.andi %53, %57 : i1
    %59 = arith.extui %58 : i1 to i32
    %c0_i32_34 = arith.constant 0 : i32
    %60 = arith.cmpi ne, %59, %c0_i32_34 : i32
    scf.if %60 {
      %c16_i32_37 = arith.constant 16 : i32
      %64 = arith.muli %arg0, %c16_i32_37 : i32
      %65 = tpu.iota {dimensions = array<i32: 0>} : vector<16x1xi32>
      %66 = vector.broadcast %64 : i32 to vector<16x1xi32>
      %67 = arith.addi %66, %65 : vector<16x1xi32>
      %c128_i32_38 = arith.constant 128 : i32
      %68 = arith.muli %arg1, %c128_i32_38 : i32
      %69 = tpu.iota {dimensions = array<i32: 1>} : vector<1x128xi32>
      %70 = vector.broadcast %68 : i32 to vector<1x128xi32>
      %71 = arith.addi %70, %69 : vector<1x128xi32>
      %72 = vector.broadcast %67 : vector<16x1xi32> to vector<16x128xi32>
      %73 = vector.broadcast %71 : vector<1x128xi32> to vector<16x128xi32>
      %74 = arith.cmpi eq, %72, %73 : vector<16x128xi32>
      %cst_39 = arith.constant 0.000000e+00 : f32
      %75 = vector.broadcast %cst_39 : f32 to vector<16x128xf32>
      %76 = arith.select %74, %31, %75 : vector<16x128xi1>, vector<16x128xf32>
      %cst_40 = arith.constant 0.000000e+00 : f32
      %77 = vector.broadcast %cst_40 : f32 to vector<16x128xf32>
      %78 = arith.select %74, %9, %77 : vector<16x128xi1>, vector<16x128xf32>
      %c0_41 = arith.constant 0 : index
      %c0_42 = arith.constant 0 : index
      %79 = vector.load %arg8[%c0_41, %c0_42] : memref<16x1xf32, #tpu.memory_space<vmem>>, vector<16x1xf32>
      %cst_43 = arith.constant dense<0.000000e+00> : vector<16xf32>
      %80 = vector.multi_reduction <add>, %76, %cst_43 [1] : vector<16x128xf32> to vector<16xf32>
      %81 = vector.shape_cast %80 : vector<16xf32> to vector<16x1xf32>
      %82 = arith.subf %79, %81 : vector<16x1xf32>
      %c0_44 = arith.constant 0 : index
      %c0_45 = arith.constant 0 : index
      %83 = vector.load %arg8[%c0_44, %c0_45] : memref<16x1xf32, #tpu.memory_space<vmem>>, vector<16x1xf32>
      tpu.vector_store %arg8[%c0_44, %c0_45], %82 {strides = array<i32>} : memref<16x1xf32, #tpu.memory_space<vmem>>, vector<16x1xf32>,
      %c0_46 = arith.constant 0 : index
      %c0_47 = arith.constant 0 : index
      %84 = vector.load %arg9[%c0_46, %c0_47] : memref<16x1xf32, #tpu.memory_space<vmem>>, vector<16x1xf32>
      %85 = arith.mulf %78, %2 : vector<16x128xf32>
      %cst_48 = arith.constant dense<0.000000e+00> : vector<16xf32>
      %86 = vector.multi_reduction <add>, %85, %cst_48 [1] : vector<16x128xf32> to vector<16xf32>
      %87 = vector.shape_cast %86 : vector<16xf32> to vector<16x1xf32>
      %88 = arith.subf %84, %87 : vector<16x1xf32>
      %c0_49 = arith.constant 0 : index
      %c0_50 = arith.constant 0 : index
      %89 = vector.load %arg9[%c0_49, %c0_50] : memref<16x1xf32, #tpu.memory_space<vmem>>, vector<16x1xf32>
      tpu.vector_store %arg9[%c0_49, %c0_50], %88 {strides = array<i32>} : memref<16x1xf32, #tpu.memory_space<vmem>>, vector<16x1xf32>,
      %c0_51 = arith.constant 0 : index
      %c0_52 = arith.constant 0 : index
      %90 = vector.load %arg10[%c0_51, %c0_52] : memref<16x1xf32, #tpu.memory_space<vmem>>, vector<16x1xf32>
      %cst_53 = arith.constant dense<0.000000e+00> : vector<16xf32>
      %91 = vector.multi_reduction <add>, %78, %cst_53 [1] : vector<16x128xf32> to vector<16xf32>
      %92 = vector.shape_cast %91 : vector<16xf32> to vector<16x1xf32>
      %93 = arith.subf %90, %92 : vector<16x1xf32>
      %c0_54 = arith.constant 0 : index
      %c0_55 = arith.constant 0 : index
      %94 = vector.load %arg10[%c0_54, %c0_55] : memref<16x1xf32, #tpu.memory_space<vmem>>, vector<16x1xf32>
      tpu.vector_store %arg10[%c0_54, %c0_55], %93 {strides = array<i32>} : memref<16x1xf32, #tpu.memory_space<vmem>>, vector<16x1xf32>,
    } else {
    }
    %c0_i32_35 = arith.constant 0 : i32
    %61 = arith.cmpi eq, %arg1, %c0_i32_35 : i32
    %62 = arith.extui %61 : i1 to i32
    %c0_i32_36 = arith.constant 0 : i32
    %63 = arith.cmpi ne, %62, %c0_i32_36 : i32
    scf.if %63 {
      %c0_37 = arith.constant 0 : index
      %c0_38 = arith.constant 0 : index
      %64 = vector.load %arg9[%c0_37, %c0_38] : memref<16x1xf32, #tpu.memory_space<vmem>>, vector<16x1xf32>
      %c0_39 = arith.constant 0 : index
      %c0_40 = arith.constant 0 : index
      %65 = vector.load %arg10[%c0_39, %c0_40] : memref<16x1xf32, #tpu.memory_space<vmem>>, vector<16x1xf32>
      %66 = arith.divf %64, %65 : vector<16x1xf32>
      %c0_41 = arith.constant 0 : index
      %c0_42 = arith.constant 0 : index
      %67 = vector.load %arg7[%c0_41, %c0_42] : memref<16x1xf32, #tpu.memory_space<vmem>>, vector<16x1xf32>
      %c0_43 = arith.constant 0 : index
      %c0_44 = arith.constant 0 : index
      %68 = vector.load %arg8[%c0_43, %c0_44] : memref<16x1xf32, #tpu.memory_space<vmem>>, vector<16x1xf32>
      %69 = math.log %68 : vector<16x1xf32>
      %70 = arith.addf %67, %69 : vector<16x1xf32>
      %71 = arith.subf %66, %70 : vector<16x1xf32>
      %cst_45 = arith.constant -1.000000e+00 : f32
      %72 = vector.broadcast %cst_45 : f32 to vector<16x1xf32>
      %73 = arith.mulf %72, %71 : vector<16x1xf32>
      %c0_46 = arith.constant 0 : index
      %c0_47 = arith.constant 0 : index
      %74 = vector.load %arg6[%c0_46, %c0_47] : memref<16x1xf32, #tpu.memory_space<vmem>>, vector<16x1xf32>
      tpu.vector_store %arg6[%c0_46, %c0_47], %73 {strides = array<i32>} : memref<16x1xf32, #tpu.memory_space<vmem>>, vector<16x1xf32>,
    } else {
    }
    return
  }
  func.func @transform_0(%arg0: i32, %arg1: i32) -> (i32, i32) {
    %c0_i32 = arith.constant 0 : i32
    %c0_i32_0 = arith.constant 0 : i32
    return %arg0, %c0_i32 : i32, i32
  }
  func.func @transform_1(%arg0: i32, %arg1: i32) -> (i32, i32) {
    %c0_i32 = arith.constant 0 : i32
    %c0_i32_0 = arith.constant 0 : i32
    return %c0_i32, %arg1 : i32, i32
  }
  func.func @transform_2(%arg0: i32, %arg1: i32) -> (i32, i32) {
    %c0_i32 = arith.constant 0 : i32
    %c0_i32_0 = arith.constant 0 : i32
    return %arg0, %c0_i32 : i32, i32
  }
  func.func @transform_3(%arg0: i32, %arg1: i32) -> (i32, i32) {
    %c0_i32 = arith.constant 0 : i32
    %c0_i32_0 = arith.constant 0 : i32
    return %c0_i32, %arg1 : i32, i32
  }
  func.func @transform_4(%arg0: i32, %arg1: i32) -> (i32, i32) {
    %c0_i32 = arith.constant 0 : i32
    %c0_i32_0 = arith.constant 0 : i32
    return %arg0, %c0_i32 : i32, i32
  }
}

</mosaic_0001>

<llo_original>
// kernel: tpu_custom_call.1
$region0: #{tpu_custom_call.1}
  #allocation0 [shape = 'u32[]', space=smem, size = 0x4, offset = 0x4, fixed_abs, tag = 'smem constant byte address 0x4 - core index']
  #allocation1 [shape = 'u32[144,128]{1,0:T(1,128)}', space=vmem, size = 0x12000, scoped, tag = 'internal scratch']
  #allocation2 [shape = 'f32[16,1]{1,0:T(8,128)}', space=vmem, size = 0x2000, scoped, tag = 'scratch operand']
  #allocation3 [shape = 'f32[16,1]{1,0:T(8,128)}', space=vmem, size = 0x2000, scoped, tag = 'scratch operand']
  #allocation4 [shape = 'f32[16,1]{1,0:T(8,128)}', space=vmem, size = 0x2000, scoped, tag = 'scratch operand']
  #allocation5 [shape = 'f32[16,1]{1,0:T(8,128)}', space=vmem, size = 0x2000, scoped, tag = 'scratch operand']
  %s0 = inlined_call_operand.vmem [shape: s32[16,1], index: 0, kind: input, shape index: {}]
  %s1 = inlined_call_operand.vmem [shape: s32[1,128], index: 1, kind: input, shape index: {}]
  %s2 = inlined_call_operand.vmem [shape: f32[16,128], index: 2, kind: input, shape index: {}]
  %s3 = inlined_call_operand.hbm [shape: f32[128,128], index: 3, kind: input, shape index: {}]
  %s4 = inlined_call_operand.vmem [shape: f32[16,1], index: 4, kind: output, shape index: {}]
  %s5 = sld [smem:[#allocation0]]
  $region42: #{tpu_custom_call.1} parent=0
    _
  %s7 = ssub.s32 1, %s5
  %s8 = scalar_select 0, %s7, %s5
  $region1: #{tpu_custom_call.1} parent=0
    #allocation6 [shape = 'u8[65536]{0}', space=vmem, size = 0x10000, scoped, tag = 'input window, operand 3, single buffered']
    #allocation7 [shape = 's32[1]{0}', space=sflag, size = 0x4, scoped, tag = 'scoped memory for tpu_custom_call.1']
    %9 = vsyncpa [#allocation7], 0
    // Predicated region
    $region2: #{tpu_custom_call.1} parent=1 // pred_check
      _
    $region3: #{tpu_custom_call.1} parent=1 // pred_check_branch
      %11 = sbr.rel (0) target = $region5
    $region4: #{tpu_custom_call.1} parent=1 // pred_region
      _
    $region5: #{tpu_custom_call.1} parent=1 // pred_fallthru
      _
    // Predicated region
    $region6: #{tpu_custom_call.1} parent=1 // pred_check
      _
    $region7: #{tpu_custom_call.1} parent=1 // pred_check_branch
      %13 = sbr.rel (0) target = $region9
    $region8: #{tpu_custom_call.1} parent=1 // pred_region
      _
    $region9: #{tpu_custom_call.1} parent=1 // pred_fallthru
      _
    // Predicated region
    $region10: #{tpu_custom_call.1} parent=1 // pred_check
      _
    $region11: #{tpu_custom_call.1} parent=1 // pred_check_branch
      %15 = sbr.rel (0) target = $region13
    $region12: #{tpu_custom_call.1} parent=1 // pred_region
      _
    $region13: #{tpu_custom_call.1} parent=1 // pred_fallthru
      _
    // Predicated region
    $region14: #{tpu_custom_call.1} parent=1 // pred_check
      _
    $region15: #{tpu_custom_call.1} parent=1 // pred_check_branch
      %17 = sbr.rel (0) target = $region17
    $region16: #{tpu_custom_call.1} parent=1 // pred_region
      %s19 = ssub.s32 2048, 2048
      %20 = vsyncadd [#allocation7], %s19
      %s21 = sshll.u32 [#allocation6], 4
      %s22 = int_to_ptr.vmem [resolvable:$true] %s21
      %27 = dma.hbm_to_vmem [thread:$0]  %s3, 2048, %s22, [#allocation7], 128, 128, 8
    $region17: #{tpu_custom_call.1} parent=1 // pred_fallthru
      _
    // Predicated region
    $region18: #{tpu_custom_call.1} parent=1 // pred_check
      _
    $region19: #{tpu_custom_call.1} parent=1 // pred_check_branch
      %29 = sbr.rel (0) target = $region21
    $region20: #{tpu_custom_call.1} parent=1 // pred_region
      %30 = dma.done [#allocation7], 2048
    $region21: #{tpu_custom_call.1} parent=1 // pred_fallthru
      _
    %v31 = vld [vmem:[%s2] sm:$0xff]
    %v32 = vld [vmem:[%s2 + $0x8] sm:$0xff]
    %v33 = vld [vmem:[#allocation6] sm:$0xff]
    %v34 = vld [vmem:[#allocation6 + $0x8] sm:$0xff]
    %v35 = vld [vmem:[#allocation6 + $0x10] sm:$0xff]
    %v36 = vld [vmem:[#allocation6 + $0x18] sm:$0xff]
    %v37 = vld [vmem:[#allocation6 + $0x20] sm:$0xff]
    %v38 = vld [vmem:[#allocation6 + $0x28] sm:$0xff]
    %v39 = vld [vmem:[#allocation6 + $0x30] sm:$0xff]
    %v40 = vld [vmem:[#allocation6 + $0x38] sm:$0xff]
    %v41 = vld [vmem:[#allocation6 + $0x40] sm:$0xff]
    %v42 = vld [vmem:[#allocation6 + $0x48] sm:$0xff]
    %v43 = vld [vmem:[#allocation6 + $0x50] sm:$0xff]
    %v44 = vld [vmem:[#allocation6 + $0x58] sm:$0xff]
    %v45 = vld [vmem:[#allocation6 + $0x60] sm:$0xff]
    %v46 = vld [vmem:[#allocation6 + $0x68] sm:$0xff]
    %v47 = vld [vmem:[#allocation6 + $0x70] sm:$0xff]
    %v48 = vld [vmem:[#allocation6 + $0x78] sm:$0xff]
    %49 = vmatprep.subr.mxu0 0.0
    %50 = vmatpush1.msra.mxu0 %v48
    %51 = vmatprep.subr.mxu0 0.0
    %52 = vmatpush1.msra.mxu0 %v47
    %53 = vmatprep.subr.mxu0 0.0
    %54 = vmatpush1.msra.mxu0 %v46
    %55 = vmatprep.subr.mxu0 0.0
    %56 = vmatpush1.msra.mxu0 %v45
    %57 = vmatprep.subr.mxu0 0.0
    %58 = vmatpush1.msra.mxu0 %v44
    %59 = vmatprep.subr.mxu0 0.0
    %60 = vmatpush1.msra.mxu0 %v43
    %61 = vmatprep.subr.mxu0 0.0
    %62 = vmatpush1.msra.mxu0 %v42
    %63 = vmatprep.subr.mxu0 0.0
    %64 = vmatpush1.msra.mxu0 %v41
    %65 = vmatprep.subr.mxu0 0.0
    %66 = vmatpush1.msra.mxu0 %v40
    %67 = vmatprep.subr.mxu0 0.0
    %68 = vmatpush1.msra.mxu0 %v39
    %69 = vmatprep.subr.mxu0 0.0
    %70 = vmatpush1.msra.mxu0 %v38
    %71 = vmatprep.subr.mxu0 0.0
    %72 = vmatpush1.msra.mxu0 %v37
    %73 = vmatprep.subr.mxu0 0.0
    %74 = vmatpush1.msra.mxu0 %v36
    %75 = vmatprep.subr.mxu0 0.0
    %76 = vmatpush1.msra.mxu0 %v35
    %77 = vmatprep.subr.mxu0 0.0
    %78 = vmatpush1.msra.mxu0 %v34
    %79 = vmatprep.subr.mxu0 0.0
    %80 = vmatpush1.msra.mxu0 %v33
    %81 = vmatprep.subr.mxu0 0.0
    %82 = vmatpush2.msra.mxu0 0.0
    %83 = vmatprep.subr.mxu0 0.0
    %84 = vmatpush2.msra.mxu0 0.0
    %85 = vmatprep.subr.mxu0 0.0
    %86 = vmatpush2.msra.mxu0 0.0
    %87 = vmatprep.subr.mxu0 0.0
    %88 = vmatpush2.msra.mxu0 0.0
    %89 = vmatprep.subr.mxu0 0.0
    %90 = vmatpush2.msra.mxu0 0.0
    %91 = vmatprep.subr.mxu0 0.0
    %92 = vmatpush2.msra.mxu0 0.0
    %93 = vmatprep.subr.mxu0 0.0
    %94 = vmatpush2.msra.mxu0 0.0
    %95 = vmatprep.subr.mxu0 0.0
    %96 = vmatpush2.msra.mxu0 0.0
    %97 = vmatprep.subr.mxu0 0.0
    %98 = vmatpush2.msra.mxu0 0.0
    %99 = vmatprep.subr.mxu0 0.0
    %100 = vmatpush2.msra.mxu0 0.0
    %101 = vmatprep.subr.mxu0 0.0
    %102 = vmatpush2.msra.mxu0 0.0
    %103 = vmatprep.subr.mxu0 0.0
    %104 = vmatpush2.msra.mxu0 0.0
    %105 = vmatprep.subr.mxu0 0.0
    %106 = vmatpush2.msra.mxu0 0.0
    %107 = vmatprep.subr.mxu0 0.0
    %108 = vmatpush2.msra.mxu0 0.0
    %109 = vmatprep.subr.mxu0 0.0
    %110 = vmatpush2.msra.mxu0 0.0
    %111 = vmatprep.subr.mxu0 0.0
    %112 = vmatpush2.msra.mxu0 0.0
    %113 = vmatprep.mubr.f32.mxu0 0.0
    %114 = vmatmul.mubr.f32.gmra.mxu0 %v31
    %v115 = vpop.f32.mrf.mxu0
    %v116 = vadd.f32 0.0, %v115
    %v117 = vpop.f32.mrf.mxu0
    %118 = vmatprep.mubr.f32.mxu0 0.0
    %119 = vmatmul.mubr.f32.gmra.mxu0 %v32
    %v120 = vpop.f32.mrf.mxu0
    %v121 = vadd.f32 0.0, %v120
    %v122 = vpop.f32.mrf.mxu0
    %123 = vdwg.mxu0
    %v124 = vld [vmem:[%s0] sm:$0xff]
    %v125 = vld [vmem:[%s0 + $0x8] sm:$0xff]
    %v126 = vld [vmem:[%s1] sm:$0x1]
    %127 = vset.pattern.permute.xlu0 0
    %128 = vperm.xlu0 %127, %v124
    %v129 = vpop.permute.xlu0 %128
    %130 = vset.pattern.permute.xlu0 0
    %131 = vperm.xlu0 %130, %v125
    %v132 = vpop.permute.xlu0 %131
    %v133 = vlaneseq
    %v134 = vshrl.u32 %v133, 7
    %v135 = vsub.s32 0, %v134
    %v136 = vrot.slane %v126, %v135
    %vm137 = vcmp.eq.s32.totalorder %v129, %v136
    %vm138 = vcmp.eq.s32.totalorder %v132, %v136
    %v139 = vsel %vm137, 1, 0
    %v140 = vsel %vm138, 1, 0
    %v141 = vcvt.s32.f32 %v139
    %v142 = vcvt.s32.f32 %v140
    %p143 = scmp.eq.s32.totalorder 0, 0
    // Predicated region
    $region22: #{tpu_custom_call.1} parent=1 // pred_check
      %p144 = pneg %p143
    $region23: #{tpu_custom_call.1} parent=1 // pred_check_branch
      %146 = sbr.rel (%p144) target = $region25
    $region24: #{tpu_custom_call.1} parent=1 // pred_region
      %vm147 = vcmask 7168
      %148 = vst.msk [vmem:[#allocation2] sm:$0xff] %vm147, -inf
      %149 = vst.msk [vmem:[#allocation2 + $0x8] sm:$0xff] %vm147, -inf
      %150 = vst.msk [vmem:[#allocation3] sm:$0xff] %vm147, 0.0
      %151 = vst.msk [vmem:[#allocation3 + $0x8] sm:$0xff] %vm147, 0.0
      %152 = vst.msk [vmem:[#allocation4] sm:$0xff] %vm147, 0.0
      %153 = vst.msk [vmem:[#allocation4 + $0x8] sm:$0xff] %vm147, 0.0
      %154 = vst.msk [vmem:[#allocation5] sm:$0xff] %vm147, 0.0
      %155 = vst.msk [vmem:[#allocation5 + $0x8] sm:$0xff] %vm147, 0.0
    $region25: #{tpu_custom_call.1} parent=1 // pred_fallthru
      _
    %v156 = vld [vmem:[#allocation2] sm:$0xff]
    %v157 = vld [vmem:[#allocation2 + $0x8] sm:$0xff]
    %158 = vmax.xlane.f32.xlu0 %v116
    %v159 = vpop.xlane.xlu0 %158
    %160 = vmax.xlane.f32.xlu0 %v121
    %v161 = vpop.xlane.xlu0 %160
    %v162 = vmax.f32 %v156, %v159
    %v163 = vmax.f32 %v157, %v161
    %v164 = vsub.f32 %v156, %v162
    %v165 = vsub.f32 %v157, %v163
    %v166 = vmul.f32 %v164, 1.442695
    %v167 = vpow.pop %v166
    %v168 = vmul.f32 %v165, 1.442695
    %v169 = vpow.pop %v168
    %171 = vset.pattern.permute.xlu0 0
    %172 = vperm.xlu0 %171, %v162
    %v173 = vpop.permute.xlu0 %172
    %176 = vset.pattern.permute.xlu0 0
    %177 = vperm.xlu0 %176, %v163
    %v178 = vpop.permute.xlu0 %177
    %v180 = vsub.f32 %v116, %v173
    %v181 = vsub.f32 %v121, %v178
    %v182 = vmul.f32 %v180, 1.442695
    %v183 = vpow.pop %v182
    %v184 = vmul.f32 %v181, 1.442695
    %v185 = vpow.pop %v184
    %s186 = smul.u32 0, 128
    %v187 = vlaneseq
    %v188 = vand.u32 %v187, 127
    %v189 = vstv %s186
    %v190 = vadd.s32 %v189, %v188
    %vm191 = vcmp.lt.s32.totalorder %v190, 16
    %v192 = vsel %vm191, 1, 0
    %vm193 = vcmp.eq.s32.totalorder %v192, 1
    %v194 = vsel %vm193, %v183, 0.0
    %v195 = vsel %vm193, %v185, 0.0
    %v196 = vld [vmem:[#allocation3] sm:$0xff]
    %v197 = vld [vmem:[#allocation3 + $0x8] sm:$0xff]
    %v198 = vmul.f32 %v167, %v196
    %v199 = vmul.f32 %v169, %v197
    %200 = vadd.xlane.f32.xlu0 %v194
    %v201 = vpop.xlane.xlu0 %200
    %202 = vadd.xlane.f32.xlu0 %v195
    %v203 = vpop.xlane.xlu0 %202
    %v204 = vadd.f32 %v198, %v201
    %v205 = vadd.f32 %v199, %v203
    %vm206 = vcmask 7168
    %207 = vst.msk [vmem:[#allocation3] sm:$0xff] %vm206, %v204
    %208 = vst.msk [vmem:[#allocation3 + $0x8] sm:$0xff] %vm206, %v205
    %v209 = vld [vmem:[#allocation4] sm:$0xff]
    %v210 = vld [vmem:[#allocation4 + $0x8] sm:$0xff]
    %v211 = vmul.f32 %v141, %v116
    %v212 = vmul.f32 %v142, %v121
    %213 = vadd.xlane.f32.xlu0 %v211
    %v214 = vpop.xlane.xlu0 %213
    %215 = vadd.xlane.f32.xlu0 %v212
    %v216 = vpop.xlane.xlu0 %215
    %v217 = vadd.f32 %v209, %v214
    %v218 = vadd.f32 %v210, %v216
    %219 = vst.msk [vmem:[#allocation4] sm:$0xff] %vm206, %v217
    %220 = vst.msk [vmem:[#allocation4 + $0x8] sm:$0xff] %vm206, %v218
    %v221 = vld [vmem:[#allocation5] sm:$0xff]
    %v222 = vld [vmem:[#allocation5 + $0x8] sm:$0xff]
    %223 = vadd.xlane.f32.xlu0 %v141
    %v224 = vpop.xlane.xlu0 %223
    %225 = vadd.xlane.f32.xlu0 %v142
    %v226 = vpop.xlane.xlu0 %225
    %v227 = vadd.f32 %v221, %v224
    %v228 = vadd.f32 %v222, %v226
    %229 = vst.msk [vmem:[#allocation5] sm:$0xff] %vm206, %v227
    %230 = vst.msk [vmem:[#allocation5 + $0x8] sm:$0xff] %vm206, %v228
    %231 = vst.msk [vmem:[#allocation2] sm:$0xff] %vm206, %v162
    %232 = vst.msk [vmem:[#allocation2 + $0x8] sm:$0xff] %vm206, %v163
    %s233 = smul.u32 0, 16
    %s234 = sadd.s32 0, 1
    %s235 = smul.u32 %s234, 128
    %p236 = scmp.lt.s32.totalorder %s233, %s235
    %s237 = sadd.s32 0, 1
    %s238 = smul.u32 %s237, 16
    %p239 = scmp.lt.s32.totalorder %s186, %s238
    %p240 = pnand %p236, %p239
    %p241 = pneg %p240
    // Predicated region
    $region26: #{tpu_custom_call.1} parent=1 // pred_check
      _
    $region27: #{tpu_custom_call.1} parent=1 // pred_check_branch
      %243 = sbr.rel (%p240) target = $region29
    $region28: #{tpu_custom_call.1} parent=1 // pred_region
      %v244 = vlaneseq
      %v245 = vshrl.u32 %v244, 7
      %v246 = vadd.s32 %v245, 8
      %v247 = vstv %s233
      %v248 = vadd.s32 %v247, %v245
      %v249 = vadd.s32 %v247, %v246
      %vm250 = vcmp.eq.s32.totalorder %v248, %v190
      %vm251 = vcmp.eq.s32.totalorder %v249, %v190
      %v252 = vsel %vm250, %v194, 0.0
      %v253 = vsel %vm251, %v195, 0.0
      %v254 = vsel %vm250, %v141, 0.0
      %v255 = vsel %vm251, %v142, 0.0
      %v256 = vld [vmem:[#allocation3] sm:$0xff]
      %v257 = vld [vmem:[#allocation3 + $0x8] sm:$0xff]
      %258 = vadd.xlane.f32.xlu0 %v252
      %v259 = vpop.xlane.xlu0 %258
      %260 = vadd.xlane.f32.xlu0 %v253
      %v261 = vpop.xlane.xlu0 %260
      %v262 = vsub.f32 %v256, %v259
      %v263 = vsub.f32 %v257, %v261
      %264 = vst.msk [vmem:[#allocation3] sm:$0xff] %vm206, %v262
      %265 = vst.msk [vmem:[#allocation3 + $0x8] sm:$0xff] %vm206, %v263
      %v266 = vld [vmem:[#allocation4] sm:$0xff]
      %v267 = vld [vmem:[#allocation4 + $0x8] sm:$0xff]
      %v268 = vmul.f32 %v254, %v116
      %v269 = vmul.f32 %v255, %v121
      %270 = vadd.xlane.f32.xlu0 %v268
      %v271 = vpop.xlane.xlu0 %270
      %272 = vadd.xlane.f32.xlu0 %v269
      %v273 = vpop.xlane.xlu0 %272
      %v274 = vsub.f32 %v266, %v271
      %v275 = vsub.f32 %v267, %v273
      %276 = vst.msk [vmem:[#allocation4] sm:$0xff] %vm206, %v274
      %277 = vst.msk [vmem:[#allocation4 + $0x8] sm:$0xff] %vm206, %v275
      %v278 = vld [vmem:[#allocation5] sm:$0xff]
      %v279 = vld [vmem:[#allocation5 + $0x8] sm:$0xff]
      %280 = vadd.xlane.f32.xlu0 %v254
      %v281 = vpop.xlane.xlu0 %280
      %282 = vadd.xlane.f32.xlu0 %v255
      %v283 = vpop.xlane.xlu0 %282
      %v284 = vsub.f32 %v278, %v281
      %v285 = vsub.f32 %v279, %v283
      %286 = vst.msk [vmem:[#allocation5] sm:$0xff] %vm206, %v284
      %287 = vst.msk [vmem:[#allocation5 + $0x8] sm:$0xff] %vm206, %v285
    $region29: #{tpu_custom_call.1} parent=1 // pred_fallthru
      _
    // Predicated region
    $region30: #{tpu_custom_call.1} parent=1 // pred_check
      %p288 = pneg %p143
    $region31: #{tpu_custom_call.1} parent=1 // pred_check_branch
      %290 = sbr.rel (%p288) target = $region33
    $region32: #{tpu_custom_call.1} parent=1 // pred_region
      %v291 = vld [vmem:[#allocation4] sm:$0xff]
      %v292 = vld [vmem:[#allocation4 + $0x8] sm:$0xff]
      %v293 = vld [vmem:[#allocation5] sm:$0xff]
      %v294 = vld [vmem:[#allocation5 + $0x8] sm:$0xff]
      %v295 = vrcp.pop %v293
      %v296 = vmul.f32 %v291, %v295
      %v297 = vrcp.pop %v294
      %v298 = vmul.f32 %v292, %v297
      %v299 = vld [vmem:[#allocation2] sm:$0xff]
      %v300 = vld [vmem:[#allocation2 + $0x8] sm:$0xff]
      %v301 = vld [vmem:[#allocation3] sm:$0xff]
      %v302 = vld [vmem:[#allocation3 + $0x8] sm:$0xff]
      %v303 = vlog2.pop %v301
      %v304 = vmul.f32 %v303, 0.6931472
      %v305 = vlog2.pop %v302
      %v306 = vmul.f32 %v305, 0.6931472
      %v307 = vadd.f32 %v299, %v304
      %v308 = vadd.f32 %v300, %v306
      %v309 = vsub.f32 %v296, %v307
      %v310 = vsub.f32 %v298, %v308
      %v311 = vmul.f32 %v309, -1.0
      %v312 = vmul.f32 %v310, -1.0
      %313 = vst.msk [vmem:[%s4] sm:$0xff] %vm206, %v311
      %314 = vst.msk [vmem:[%s4 + $0x8] sm:$0xff] %vm206, %v312
    $region33: #{tpu_custom_call.1} parent=1 // pred_fallthru
      _
    // Predicated region
    $region34: #{tpu_custom_call.1} parent=1 // pred_check
      _
    $region35: #{tpu_custom_call.1} parent=1 // pred_check_branch
      %316 = sbr.rel (0) target = $region37
    $region36: #{tpu_custom_call.1} parent=1 // pred_region
      _
    $region37: #{tpu_custom_call.1} parent=1 // pred_fallthru
      _
    // Predicated region
    $region38: #{tpu_custom_call.1} parent=1 // pred_check
      _
    $region39: #{tpu_custom_call.1} parent=1 // pred_check_branch
      %318 = sbr.rel (0) target = $region41
    $region40: #{tpu_custom_call.1} parent=1 // pred_region
      _
    $region41: #{tpu_custom_call.1} parent=1 // pred_fallthru
      _
    %319 = vsyncpa [#allocation7], 1

</llo_original>
